<compile_context>
chip_gen: v5e
topology: v5e:2x2
jax: 0.10.0
libtpu: 0.0.40
codegen_flags: <defaults>
</compile_context>

<pallas_src>
import functools
import math

import jax
import jax.numpy as jnp
from jax.experimental import pallas as pl
from jax.experimental.pallas import tpu as pltpu


def _critic_kernel(x_ref, w1_ref, w2_ref, aux_ref, o_ref):
    # aux rows: 0 = b1, 1 = b2, 2 = out_layer.weight row, 3 = [b3, 0, ...]
    aux = aux_ref[...]                  # (4, H) f32, resident across steps
    b1 = aux[0:1, :]                    # (1, H)
    b2 = aux[1:2, :]
    w3 = aux[2:3, :]
    b3 = aux[3:4, 0:1]                  # (1, 1)

    # Elementwise front-end stays f32 (v5e VPU/EUP have no bf16 path).
    # Faithful to torch: log(x + 1).
    h = jnp.log(x_ref[...] + 1.0)

    # Two MXU matmuls with bf16 operands (native MXU dtype on v5e/v6e/v7x),
    # f32 accumulation.  Cast only at the dot boundary.
    a1 = jnp.dot(h.astype(jnp.bfloat16), w1_ref[...],
                 preferred_element_type=jnp.float32) + b1
    z1 = jnp.maximum(a1, 0.0)
    a2 = jnp.dot(z1.astype(jnp.bfloat16), w2_ref[...],
                 preferred_element_type=jnp.float32) + b2
    z2 = jnp.maximum(a2, 0.0)

    # Final Linear(64 -> 1): VPU multiply + XLU lane reduce.
    a3 = jnp.sum(z2 * w3, axis=-1, keepdims=True) + b3
    o_ref[...] = a3.astype(o_ref.dtype)


def _round_up(n, m):
    return ((n + m - 1) // m) * m


def _cdiv(a, b):
    return (a + b - 1) // b


def _choose_tiling(B, F, block_b):
    """Pick (bb, B_pad): batch-tile rows and padded batch for a [B, F] input."""
    B8 = _round_up(max(B, 1), 8)
    # Keep the double-buffered x tile well inside the scoped-VMEM default on
    # every generation (v5e default 16 MiB): <= ~3 MiB per x buffer.
    vmem_rows = max(8, (((3 << 20) // max(4 * F, 4)) // 8) * 8)
    block_b = max(8, min(block_b, vmem_rows))
    if B8 <= 8:
        steps = 1                        # tiny batch: single step
    else:
        # >= 2 (and even) steps so the "parallel" grid axis feeds both v7x
        # TensorCores with balanced work; cap rows per step at block_b.
        steps = max(2, _cdiv(B8, block_b))
        steps += steps % 2
    bb = _round_up(_cdiv(B8, steps), 8)  # minimizes tail padding
    B_pad = _round_up(B8, bb)
    return bb, B_pad


@functools.partial(jax.jit, static_argnames=("block_b",))
def critic_forward(x, params, block_b=4096):
    """x: [B, F] float32.  params: dict of f32 weights/biases (see init)."""
    B, F = x.shape
    H = params["w1"].shape[1]   # 64

    bb, B_pad = _choose_tiling(B, F, block_b)
    if B_pad != B:
        # Zero-pad rows: log(0+1)=0 -> padded rows stay finite; trimmed below.
        x = jnp.pad(x, ((0, B_pad - B), (0, 0)))
    grid = (B_pad // bb,)

    # MXU operands in bf16 (native MXU dtype); casts are tiny / one-off.
    w1 = params["w1"].astype(jnp.bfloat16)
    w2 = params["w2"].astype(jnp.bfloat16)
    # One lane-aligned slab for the four tiny vectors: b1, b2, w3 row, b3.
    aux = jnp.zeros((4, H), jnp.float32)
    aux = aux.at[0, :].set(params["b1"].reshape(-1))
    aux = aux.at[1, :].set(params["b2"].reshape(-1))
    aux = aux.at[2, :].set(params["w3"].reshape(-1))
    aux = aux.at[3, 0].set(params["b3"].reshape(-1)[0])

    full = lambda shape: pl.BlockSpec(shape, lambda i: (0, 0))

    # Advisory cost hint for XLA's scheduler around the custom call.
    flops = 2 * B_pad * (F * H + H * H + H) + 4 * B_pad * H
    bytes_accessed = 4 * B_pad * (F + 1) + 2 * (F * H + H * H) + 4 * 4 * H
    cost = pl.CostEstimate(flops=flops, transcendentals=B_pad * F,
                           bytes_accessed=bytes_accessed)

    out = pl.pallas_call(
        _critic_kernel,
        out_shape=jax.ShapeDtypeStruct((B_pad, 1), jnp.float32),
        grid_spec=pltpu.PrefetchScalarGridSpec(
            num_scalar_prefetch=0,
            grid=grid,
            in_specs=[
                pl.BlockSpec((bb, F), lambda i: (i, 0)),   # x batch tile
                full((F, H)),    # W1^T [in, out], bf16, resident
                full((H, H)),    # W2^T,           bf16, resident
                full((4, H)),    # [b1; b2; w3; b3], f32, resident
            ],
            out_specs=pl.BlockSpec((bb, 1), lambda i: (i, 0)),
        ),
        compiler_params=pltpu.CompilerParams(
            dimension_semantics=("parallel",),   # shards steps across v7x TCs
        ),
        cost_estimate=cost,
    )(x, w1, w2, aux)
    return out[:B]


def init_critic_params(key, feature_space, hidden=64):
    """Mirrors torch.nn.Linear default init U(-1/sqrt(fan_in), +1/sqrt(fan_in)).

    W1/W2 stored pre-transposed as [in, out]; w3 as the torch [1, 64] row;
    biases as [1, out]."""
    ks = jax.random.split(key, 6)

    def uniform(k, shape, fan_in):
        bound = 1.0 / math.sqrt(fan_in)
        return jax.random.uniform(k, shape, jnp.float32, -bound, bound)

    return {
        "w1": uniform(ks[0], (feature_space, hidden), feature_space),
        "b1": uniform(ks[1], (1, hidden), feature_space),
        "w2": uniform(ks[2], (hidden, hidden), hidden),
        "b2": uniform(ks[3], (1, hidden), hidden),
        "w3": uniform(ks[4], (1, hidden), hidden),   # out_layer.weight [1, 64]
        "b3": uniform(ks[5], (1, 1), hidden),
    }


def critic_reference(x, p):
    """Pure-JAX f32 reference of the PyTorch forward for verification."""
    h = jnp.log(x + 1.0)
    h = jnp.maximum(h @ p["w1"] + p["b1"], 0.0)
    h = jnp.maximum(h @ p["w2"] + p["b2"], 0.0)
    return h @ p["w3"].T + p["b3"]


# TODO(synk): torch.optim.Adam / .to(device) in __init__ are training/runtime
# plumbing with no forward-pass equivalent; only forward() is implemented.

if __name__ == "__main__":
    key = jax.random.PRNGKey(0)
    k_x, k_x2, k_p = jax.random.split(key, 3)

    feature_space = 32
    params = init_critic_params(k_p, feature_space)

    # Small batch: exercises the 2-step "parallel" grid (bb=8, grid=(2,)).
    x = jax.random.uniform(k_x, (16, feature_space), jnp.float32, 0.0, 2.0)
    out = jax.block_until_ready(critic_forward(x, params))
    ref = critic_reference(x, params)
    assert out.shape == (16, 1)
    # bf16 MXU operands -> tolerances loosened vs the f32 reference.
    assert jnp.allclose(out, ref, atol=2e-2, rtol=2e-2), "mismatch vs reference"

    # Ragged batch exercises the pad-and-trim path (no divisibility assert).
    x2 = jax.random.uniform(k_x2, (10, feature_space), jnp.float32, 0.0, 2.0)
    out2 = jax.block_until_ready(critic_forward(x2, params))
    ref2 = critic_reference(x2, params)
    assert out2.shape == (10, 1)
    assert jnp.allclose(out2, ref2, atol=2e-2, rtol=2e-2), "mismatch vs reference (ragged)"

    print("KERNEL_OK")
</pallas_src>

<mosaic_0001>
module attributes {stable_mosaic.version = 11 : i64} {
  func.func @_critic_kernel(%arg0: i32, %arg1: memref<8x32xf32, #tpu.memory_space<vmem>>, %arg2: memref<32x64xbf16, #tpu.memory_space<vmem>>, %arg3: memref<64x64xbf16, #tpu.memory_space<vmem>>, %arg4: memref<4x64xf32, #tpu.memory_space<vmem>>, %arg5: memref<8x1xf32, #tpu.memory_space<vmem>>) attributes {dimension_semantics = [#tpu.dimension_semantics<parallel>], iteration_bounds = array<i64: 2>, scalar_prefetch = 0 : i64, scratch_operands = 0 : i64, tpu.core_type = #tpu.core_type<tc>, window_params = [{transform_indices = @transform_0, window_bounds = array<i64: 8, 32>}, {pipeline_mode = #tpu.pipeline_mode<synchronous>, transform_indices = @transform_1, window_bounds = array<i64: 32, 64>}, {pipeline_mode = #tpu.pipeline_mode<synchronous>, transform_indices = @transform_2, window_bounds = array<i64: 64, 64>}, {pipeline_mode = #tpu.pipeline_mode<synchronous>, transform_indices = @transform_3, window_bounds = array<i64: 4, 64>}, {transform_indices = @transform_4, window_bounds = array<i64: 8, 1>}]} {
    %c0 = arith.constant 0 : index
    %c0_0 = arith.constant 0 : index
    %0 = vector.load %arg4[%c0, %c0_0] : memref<4x64xf32, #tpu.memory_space<vmem>>, vector<4x64xf32>
    %1 = vector.extract_strided_slice %0 {offsets = [0, 0], sizes = [1, 64], strides = [1, 1]} : vector<4x64xf32> to vector<1x64xf32>
    %2 = vector.extract_strided_slice %0 {offsets = [1, 0], sizes = [1, 64], strides = [1, 1]} : vector<4x64xf32> to vector<1x64xf32>
    %3 = vector.extract_strided_slice %0 {offsets = [2, 0], sizes = [1, 64], strides = [1, 1]} : vector<4x64xf32> to vector<1x64xf32>
    %4 = vector.extract_strided_slice %0 {offsets = [3, 0], sizes = [1, 1], strides = [1, 1]} : vector<4x64xf32> to vector<1x1xf32>
    %c0_1 = arith.constant 0 : index
    %c0_2 = arith.constant 0 : index
    %5 = vector.load %arg1[%c0_1, %c0_2] : memref<8x32xf32, #tpu.memory_space<vmem>>, vector<8x32xf32>
    %cst = arith.constant 1.000000e+00 : f32
    %6 = vector.broadcast %cst : f32 to vector<8x32xf32>
    %7 = arith.addf %5, %6 : vector<8x32xf32>
    %8 = math.log %7 : vector<8x32xf32>
    %9 = arith.truncf %8 : vector<8x32xf32> to vector<8x32xbf16>
    %c0_3 = arith.constant 0 : index
    %c0_4 = arith.constant 0 : index
    %10 = vector.load %arg2[%c0_3, %c0_4] : memref<32x64xbf16, #tpu.memory_space<vmem>>, vector<32x64xbf16>
    %cst_5 = arith.constant dense<0.000000e+00> : vector<8x64xf32>
    %11 = tpu.matmul %9, %10, %cst_5 {dimension_numbers = #tpu.dot_dimension_numbers<[1], [0], [0], [1], [0, 0, 1, 1], [], []>} : vector<8x32xbf16>, vector<32x64xbf16>, vector<8x64xf32> -> vector<8x64xf32>
    %12 = vector.broadcast %1 : vector<1x64xf32> to vector<8x64xf32>
    %13 = arith.addf %11, %12 : vector<8x64xf32>
    %cst_6 = arith.constant 0.000000e+00 : f32
    %14 = vector.broadcast %cst_6 : f32 to vector<8x64xf32>
    %15 = arith.maximumf %13, %14 : vector<8x64xf32>
    %16 = arith.truncf %15 : vector<8x64xf32> to vector<8x64xbf16>
    %c0_7 = arith.constant 0 : index
    %c0_8 = arith.constant 0 : index
    %17 = vector.load %arg3[%c0_7, %c0_8] : memref<64x64xbf16, #tpu.memory_space<vmem>>, vector<64x64xbf16>
    %cst_9 = arith.constant dense<0.000000e+00> : vector<8x64xf32>
    %18 = tpu.matmul %16, %17, %cst_9 {dimension_numbers = #tpu.dot_dimension_numbers<[1], [0], [0], [1], [0, 0, 1, 1], [], []>} : vector<8x64xbf16>, vector<64x64xbf16>, vector<8x64xf32> -> vector<8x64xf32>
    %19 = vector.broadcast %2 : vector<1x64xf32> to vector<8x64xf32>
    %20 = arith.addf %18, %19 : vector<8x64xf32>
    %cst_10 = arith.constant 0.000000e+00 : f32
    %21 = vector.broadcast %cst_10 : f32 to vector<8x64xf32>
    %22 = arith.maximumf %20, %21 : vector<8x64xf32>
    %23 = vector.broadcast %3 : vector<1x64xf32> to vector<8x64xf32>
    %24 = arith.mulf %22, %23 : vector<8x64xf32>
    %cst_11 = arith.constant dense<0.000000e+00> : vector<8xf32>
    %25 = vector.multi_reduction <add>, %24, %cst_11 [1] : vector<8x64xf32> to vector<8xf32>
    %26 = vector.shape_cast %25 : vector<8xf32> to vector<8x1xf32>
    %27 = vector.broadcast %4 : vector<1x1xf32> to vector<8x1xf32>
    %28 = arith.addf %26, %27 : vector<8x1xf32>
    %c0_12 = arith.constant 0 : index
    %c0_13 = arith.constant 0 : index
    %29 = vector.load %arg5[%c0_12, %c0_13] : memref<8x1xf32, #tpu.memory_space<vmem>>, vector<8x1xf32>
    tpu.vector_store %arg5[%c0_12, %c0_13], %28 {strides = array<i32>} : memref<8x1xf32, #tpu.memory_space<vmem>>, vector<8x1xf32>,
    return
  }
  func.func @transform_0(%arg0: i32) -> (i32, i32) {
    %c0_i32 = arith.constant 0 : i32
    %c0_i32_0 = arith.constant 0 : i32
    return %arg0, %c0_i32 : i32, i32
  }
  func.func @transform_1(%arg0: i32) -> (i32, i32) {
    %c0_i32 = arith.constant 0 : i32
    %c0_i32_0 = arith.constant 0 : i32
    %c0_i32_1 = arith.constant 0 : i32
    return %c0_i32, %c0_i32_0 : i32, i32
  }
  func.func @transform_2(%arg0: i32) -> (i32, i32) {
    %c0_i32 = arith.constant 0 : i32
    %c0_i32_0 = arith.constant 0 : i32
    %c0_i32_1 = arith.constant 0 : i32
    return %c0_i32, %c0_i32_0 : i32, i32
  }
  func.func @transform_3(%arg0: i32) -> (i32, i32) {
    %c0_i32 = arith.constant 0 : i32
    %c0_i32_0 = arith.constant 0 : i32
    %c0_i32_1 = arith.constant 0 : i32
    return %c0_i32, %c0_i32_0 : i32, i32
  }
  func.func @transform_4(%arg0: i32) -> (i32, i32) {
    %c0_i32 = arith.constant 0 : i32
    %c0_i32_0 = arith.constant 0 : i32
    return %arg0, %c0_i32 : i32, i32
  }
}

</mosaic_0001>

<llo_original>
// kernel: critic_forward.1
$region0: #{critic_forward.1}
  #allocation0 [shape = 'u32[]', space=smem, size = 0x4, offset = 0x4, fixed_abs, tag = 'smem constant byte address 0x4 - core index']
  #allocation1 [shape = 'u32[72,128]{1,0:T(1,128)}', space=vmem, size = 0x9000, scoped, tag = 'internal scratch']
  %s0 = inlined_call_operand.vmem [shape: f32[16,32], index: 0, kind: input, shape index: {}]
  %s1 = inlined_call_operand.vmem [shape: bf16[32,64], index: 1, kind: input, shape index: {}]
  %s2 = inlined_call_operand.vmem [shape: bf16[64,64], index: 2, kind: input, shape index: {}]
  %s3 = inlined_call_operand.vmem [shape: f32[4,64], index: 3, kind: input, shape index: {}]
  %s4 = inlined_call_operand.vmem [shape: f32[16,1], index: 4, kind: output, shape index: {}]
  %s5 = sld [smem:[#allocation0]]
  $region49: #{critic_forward.1} parent=0
    _
  %s7 = ssub.s32 1, %s5
  %s8 = scalar_select 0, %s7, %s5
  loop: start=0, step=1, limit=4
  $region2: #{critic_forward.1} parent=0 // loop_pre_header
    _
  $region3: #{critic_forward.1} parent=0 // loop_header
    %s10 = sphi 0, %s14
    %p11 = scmp.ge.s32.totalorder %s10, 4
    %s20 = sphi 0, %s22
    %s23 = sphi 0, %s20
    %s24 = sphi 0, %s23
    %s40 = sphi 0, %s24
    %s44 = sphi 0, %s44
    %s46 = sphi 0, %s44
    %s47 = sphi 0, %s46
    %s61 = sphi 0, %s47
    %s65 = sphi 0, %s65
    %s67 = sphi 0, %s65
    %s68 = sphi 0, %s67
    %s82 = sphi 0, %s68
    %s86 = sphi 0, %s86
    %s88 = sphi 0, %s86
    %s89 = sphi 0, %s88
    %s103 = sphi 0, %s89
    %s109 = sphi 0, %s111
    %s112 = sphi 0, %s109
    %s113 = sphi 0, %s112
    %s129 = sphi 0, %s113
  $region4: #{critic_forward.1} parent=0 // loop_header_branch
    %13 = sbr.rel (%p11) target = $region8
  $region5: #{critic_forward.1} parent=0 // loop_body
    %s15 = ssub.s32 %s10, 1
    %s16 = ssub.s32 %s10, 2
    %s17 = sadd.s32 %s10, 1
    %s18 = ssub.s32 %s10, %s17
    %p19 = scmp.eq.s32.totalorder %s18, 0
    %s21 = sadd.s32 %s20, 1
    %s22 = scalar_select %p19, %s20, %s21
    %p25 = pneg %p19
    %p26 = scmp.eq.s32.totalorder %s10, 1
    %p27 = por %p25, %p26
    %p28 = scmp.ne.s32.totalorder %s20, %s23
    %p29 = scmp.eq.s32.totalorder %s10, 0
    %p30 = por %p28, %p29
    %p31 = scmp.ne.s32.totalorder %s20, %s23
    %p32 = scmp.eq.s32.totalorder %s15, 1
    %p33 = por %p31, %p32
    %p34 = scmp.ne.s32.totalorder %s23, %s24
    %p35 = scmp.eq.s32.totalorder %s15, 0
    %p36 = por %p34, %p35
    %p37 = scmp.ne.s32.totalorder %s23, %s24
    %p38 = scmp.eq.s32.totalorder %s16, 1
    %p39 = por %p37, %p38
    %p41 = scmp.ne.s32.totalorder %s24, %s40
    %p42 = scmp.eq.s32.totalorder %s16, 0
    %p43 = por %p41, %p42
    %s45 = sadd.s32 %s44, 1
    %p48 = scmp.eq.s32.totalorder %s10, 1
    %p49 = scmp.ne.s32.totalorder %s44, %s46
    %p50 = scmp.eq.s32.totalorder %s10, 0
    %p51 = por %p49, %p50
    %p52 = scmp.ne.s32.totalorder %s44, %s46
    %p53 = scmp.eq.s32.totalorder %s15, 1
    %p54 = por %p52, %p53
    %p55 = scmp.ne.s32.totalorder %s46, %s47
    %p56 = scmp.eq.s32.totalorder %s15, 0
    %p57 = por %p55, %p56
    %p58 = scmp.ne.s32.totalorder %s46, %s47
    %p59 = scmp.eq.s32.totalorder %s16, 1
    %p60 = por %p58, %p59
    %p62 = scmp.ne.s32.totalorder %s47, %s61
    %p63 = scmp.eq.s32.totalorder %s16, 0
    %p64 = por %p62, %p63
    %s66 = sadd.s32 %s65, 1
    %p69 = scmp.eq.s32.totalorder %s10, 1
    %p70 = scmp.ne.s32.totalorder %s65, %s67
    %p71 = scmp.eq.s32.totalorder %s10, 0
    %p72 = por %p70, %p71
    %p73 = scmp.ne.s32.totalorder %s65, %s67
    %p74 = scmp.eq.s32.totalorder %s15, 1
    %p75 = por %p73, %p74
    %p76 = scmp.ne.s32.totalorder %s67, %s68
    %p77 = scmp.eq.s32.totalorder %s15, 0
    %p78 = por %p76, %p77
    %p79 = scmp.ne.s32.totalorder %s67, %s68
    %p80 = scmp.eq.s32.totalorder %s16, 1
    %p81 = por %p79, %p80
    %p83 = scmp.ne.s32.totalorder %s68, %s82
    %p84 = scmp.eq.s32.totalorder %s16, 0
    %p85 = por %p83, %p84
    %s87 = sadd.s32 %s86, 1
    %p90 = scmp.eq.s32.totalorder %s10, 1
    %p91 = scmp.ne.s32.totalorder %s86, %s88
    %p92 = scmp.eq.s32.totalorder %s10, 0
    %p93 = por %p91, %p92
    %p94 = scmp.ne.s32.totalorder %s86, %s88
    %p95 = scmp.eq.s32.totalorder %s15, 1
    %p96 = por %p94, %p95
    %p97 = scmp.ne.s32.totalorder %s88, %s89
    %p98 = scmp.eq.s32.totalorder %s15, 0
    %p99 = por %p97, %p98
    %p100 = scmp.ne.s32.totalorder %s88, %s89
    %p101 = scmp.eq.s32.totalorder %s16, 1
    %p102 = por %p100, %p101
    %p104 = scmp.ne.s32.totalorder %s89, %s103
    %p105 = scmp.eq.s32.totalorder %s16, 0
    %p106 = por %p104, %p105
    %s107 = ssub.s32 %s10, %s17
    %p108 = scmp.eq.s32.totalorder %s107, 0
    %s110 = sadd.s32 %s109, 1
    %s111 = scalar_select %p108, %s109, %s110
    %p114 = pneg %p108
    %p115 = scmp.eq.s32.totalorder %s10, 1
    %p116 = por %p114, %p115
    %p117 = scmp.ne.s32.totalorder %s109, %s112
    %p118 = scmp.eq.s32.totalorder %s10, 0
    %p119 = por %p117, %p118
    %p120 = scmp.ne.s32.totalorder %s109, %s112
    %p121 = scmp.eq.s32.totalorder %s15, 1
    %p122 = por %p120, %p121
    %p123 = scmp.ne.s32.totalorder %s112, %s113
    %p124 = scmp.eq.s32.totalorder %s15, 0
    %p125 = por %p123, %p124
    %p126 = scmp.ne.s32.totalorder %s112, %s113
    %p127 = scmp.eq.s32.totalorder %s16, 1
    %p128 = por %p126, %p127
    %p130 = scmp.ne.s32.totalorder %s113, %s129
    %p131 = scmp.eq.s32.totalorder %s16, 0
    %p132 = por %p130, %p131
    %p133 = scmp.le.s32.totalorder 1, %s10
    %p134 = scmp.lt.s32.totalorder %s10, 3
    %p135 = pnand %p133, %p134
    %p136 = pneg %p135
    // Predicated region
    $region9: #{critic_forward.1} parent=5 // pred_check
      _
    $region10: #{critic_forward.1} parent=5 // pred_check_branch
      %138 = sbr.rel (%p135) target = $region12
    $region11: #{critic_forward.1} parent=5 // pred_region
      %s139 = ssub.s32 %s10, 1
      // Predicated region
      $region13: #{critic_forward.1} parent=11 // pred_check
        %p140 = pneg %p57
      $region14: #{critic_forward.1} parent=11 // pred_check_branch
        %142 = sbr.rel (%p140) target = $region16
      $region15: #{critic_forward.1} parent=11 // pred_region
        _
      $region16: #{critic_forward.1} parent=11 // pred_fallthru
        _
      // Predicated region
      $region17: #{critic_forward.1} parent=11 // pred_check
        %p143 = pneg %p78
      $region18: #{critic_forward.1} parent=11 // pred_check_branch
        %145 = sbr.rel (%p143) target = $region20
      $region19: #{critic_forward.1} parent=11 // pred_region
        _
      $region20: #{critic_forward.1} parent=11 // pred_fallthru
        _
      // Predicated region
      $region21: #{critic_forward.1} parent=11 // pred_check
        %p146 = pneg %p99
      $region22: #{critic_forward.1} parent=11 // pred_check_branch
        %148 = sbr.rel (%p146) target = $region24
      $region23: #{critic_forward.1} parent=11 // pred_region
        _
      $region24: #{critic_forward.1} parent=11 // pred_fallthru
        _
    $region12: #{critic_forward.1} parent=5 // pred_fallthru
      _
    %p149 = scmp.lt.s32.totalorder %s10, 2
    // Predicated region
    $region25: #{critic_forward.1} parent=5 // pred_check
      %p150 = pneg %p149
    $region26: #{critic_forward.1} parent=5 // pred_check_branch
      %152 = sbr.rel (%p150) target = $region28
    $region27: #{critic_forward.1} parent=5 // pred_region
      // Predicated region
      $region29: #{critic_forward.1} parent=27 // pred_check
        %p153 = pneg %p30
      $region30: #{critic_forward.1} parent=27 // pred_check_branch
        %155 = sbr.rel (%p153) target = $region32
      $region31: #{critic_forward.1} parent=27 // pred_region
        %p156 = scmp.lt.s32.totalorder %s10, 1
        %s157 = scalar_select %p156, %s10, 1
        %s158 = smul.addr %s157, 8
        %s159 = scalar_lea.vmem %s0, %s158
      $region32: #{critic_forward.1} parent=27 // pred_fallthru
        _
    $region28: #{critic_forward.1} parent=5 // pred_fallthru
      _
    %p160 = scmp.le.s32.totalorder 1, %s10
    %p161 = scmp.lt.s32.totalorder %s10, 3
    %p162 = pnand %p160, %p161
    %p163 = pneg %p162
    // Predicated region
    $region33: #{critic_forward.1} parent=5 // pred_check
      _
    $region34: #{critic_forward.1} parent=5 // pred_check_branch
      %165 = sbr.rel (%p162) target = $region36
    $region35: #{critic_forward.1} parent=5 // pred_region
      %s166 = ssub.s32 %s10, 1
      %p167 = scmp.lt.s32.totalorder %s15, 1
      %s168 = scalar_select %p167, %s15, 1
      %s169 = smul.addr %s168, 8
      %s170 = scalar_lea.vmem %s0, %s169
      %p171 = pneg %p36
      %p172 = pneg %p33
      %p173 = pneg %p57
      %p174 = pneg %p54
      %p175 = pneg %p78
      %p176 = pneg %p75
      %p177 = pneg %p99
      %p178 = pneg %p96
      %p179 = pneg %p125
      %p180 = pneg %p122
      %p181 = scmp.lt.s32.totalorder %s15, 1
      %s182 = scalar_select %p181, %s15, 1
      %s183 = smul.addr %s182, 8
      %s184 = scalar_lea.vmem %s4, %s183
      %p185 = scmp.lt.s32.totalorder %s15, 1
      %s186 = scalar_select %p185, %s15, 1
      %s187 = smul.addr %s186, 8
      %s188 = scalar_lea.vmem %s0, %s187
      %p189 = scmp.lt.s32.totalorder %s15, 1
      %s190 = scalar_select %p189, %s15, 1
      %s191 = smul.addr %s190, 8
      %s192 = scalar_lea.vmem %s4, %s191
      %v194 = vld [vmem:[%s3] sm:$0xf]
      %v195 = vld [vmem:[%s188] sm:$0xff]
      %v196 = vadd.f32 %v195, 1.0
      %v197 = vlog2.pop %v196
      %v198 = vmul.f32 %v197, 0.6931472
      %v199 = vpack.c.bf16 %v198, %v198
      %v200 = vld [vmem:[%s1] sm:$0xf]
      %v201 = vld [vmem:[%s1 + $0x4] sm:$0xf]
      %v202 = vld [vmem:[%s1 + $0x8] sm:$0xf]
      %v203 = vld [vmem:[%s1 + $0xc] sm:$0xf]
      %v204 = vperm.slane %v194, 0
      %v209 = vunpack.c.l.b16 %v200
      %v210 = vunpack.c.l.b16 %v201
      %v211 = vunpack.c.l.b16 %v202
      %v212 = vunpack.c.l.b16 %v203
      %v213 = vpack.c.b16 %v210, %v209
      %v214 = vpack.c.b16 %v212, %v211
      %vm217 = vcmask 261120
      %v219 = vsel %vm217, %v199, 0
      %221 = vmatpush.bf16.msra.mxu0 0
      %222 = vmatpush.bf16.msra.mxu0 0
      %223 = vmatpush.bf16.msra.mxu0 0
      %224 = vmatpush.bf16.msra.mxu0 0
      %225 = vmatpush.bf16.msra.mxu0 0
      %226 = vmatpush.bf16.msra.mxu0 0
      %227 = vmatpush.bf16.msra.mxu0 %v214
      %228 = vmatpush.bf16.msra.mxu0 %v213
      %229 = vmatmul.bf16.gmra.mxu0 %v219
      %v230 = vpop.f32.mrf.mxu0
      %v231 = vadd.f32 %v204, %v230
      %v232 = vpop.f32.mrf.mxu0
      %233 = vdwg.mxu0
      %v234 = vmax.f32 %v231, 0.0
      %v235 = vpack.c.bf16 %v234, %v234
      %v236 = vld [vmem:[%s2] sm:$0xf]
      %v237 = vld [vmem:[%s2 + $0x4] sm:$0xf]
      %v238 = vld [vmem:[%s2 + $0x8] sm:$0xf]
      %v239 = vld [vmem:[%s2 + $0xc] sm:$0xf]
      %v240 = vld [vmem:[%s2 + $0x10] sm:$0xf]
      %v241 = vld [vmem:[%s2 + $0x14] sm:$0xf]
      %v242 = vld [vmem:[%s2 + $0x18] sm:$0xf]
      %v243 = vld [vmem:[%s2 + $0x1c] sm:$0xf]
      %v244 = vperm.slane %v194, 1
      %v253 = vunpack.c.l.b16 %v236
      %v254 = vunpack.c.l.b16 %v237
      %v255 = vunpack.c.l.b16 %v238
      %v256 = vunpack.c.l.b16 %v239
      %v257 = vunpack.c.l.b16 %v240
      %v258 = vunpack.c.l.b16 %v241
      %v259 = vunpack.c.l.b16 %v242
      %v260 = vunpack.c.l.b16 %v243
      %v261 = vpack.c.b16 %v254, %v253
      %v262 = vpack.c.b16 %v256, %v255
      %v263 = vpack.c.b16 %v258, %v257
      %v264 = vpack.c.b16 %v260, %v259
      %vm269 = vcmask 523264
      %v271 = vsel %vm269, %v235, 0
      %273 = vmatpush.bf16.msra.mxu0 0
      %274 = vmatpush.bf16.msra.mxu0 0
      %275 = vmatpush.bf16.msra.mxu0 0
      %276 = vmatpush.bf16.msra.mxu0 0
      %277 = vmatpush.bf16.msra.mxu0 %v264
      %278 = vmatpush.bf16.msra.mxu0 %v263
      %279 = vmatpush.bf16.msra.mxu0 %v262
      %280 = vmatpush.bf16.msra.mxu0 %v261
      %281 = vmatmul.bf16.gmra.mxu0 %v271
      %v282 = vpop.f32.mrf.mxu0
      %v283 = vadd.f32 %v244, %v282
      %v284 = vpop.f32.mrf.mxu0
      %285 = vdwg.mxu0
      %v286 = vmax.f32 %v283, 0.0
      %v287 = vperm.slane %v194, 2
      %v288 = vmul.f32 %v286, %v287
      %v289 = vsel %vm269, %v288, 0.0
      %290 = vadd.xlane.f32.xlu0 %v289
      %v291 = vpop.xlane.xlu0 %290
      %v292 = vperm.slane %v194, 3
      %v293 = vadd.f32 %v291, %v292
      %vm294 = vcmask 7168
      %295 = vst.msk [vmem:[%s192] sm:$0xff] %vm294, %v293
      %p296 = scmp.lt.s32.totalorder %s15, 1
      %s297 = scalar_select %p296, %s15, 1
      %s298 = smul.addr %s297, 8
      %s299 = scalar_lea.vmem %s4, %s298
      // Predicated region
      $region37: #{critic_forward.1} parent=35 // pred_check
        %p300 = pneg %p122
      $region38: #{critic_forward.1} parent=35 // pred_check_branch
        %302 = sbr.rel (%p300) target = $region40
      $region39: #{critic_forward.1} parent=35 // pred_region
        _
      $region40: #{critic_forward.1} parent=35 // pred_fallthru
        _
    $region36: #{critic_forward.1} parent=5 // pred_fallthru
      _
    %p303 = scmp.le.s32.totalorder 2, %s10
    // Predicated region
    $region41: #{critic_forward.1} parent=5 // pred_check
      %p304 = pneg %p303
    $region42: #{critic_forward.1} parent=5 // pred_check_branch
      %306 = sbr.rel (%p304) target = $region44
    $region43: #{critic_forward.1} parent=5 // pred_region
      %s307 = ssub.s32 %s10, 2
      // Predicated region
      $region45: #{critic_forward.1} parent=43 // pred_check
        %p308 = pneg %p128
      $region46: #{critic_forward.1} parent=43 // pred_check_branch
        %310 = sbr.rel (%p308) target = $region48
      $region47: #{critic_forward.1} parent=43 // pred_region
        %p311 = scmp.lt.s32.totalorder %s16, 1
        %s312 = scalar_select %p311, %s16, 1
        %s313 = smul.addr %s312, 8
        %s314 = scalar_lea.vmem %s4, %s313
      $region48: #{critic_forward.1} parent=43 // pred_fallthru
        _
    $region44: #{critic_forward.1} parent=5 // pred_fallthru
      _
  $region6: #{critic_forward.1} parent=0 // loop_footer
    %s14 = sadd.s32 1, %s10
  $region7: #{critic_forward.1} parent=0 // loop_footer_branch
    %9 = sbr.rel target = $region3
  $region8: #{critic_forward.1} parent=0 // loop_exit
    _

</llo_original>
